<compile_context>
chip_gen: v7x
topology: tpu7x:2x2x1
jax: 0.10.0
libtpu: 0.0.40
codegen_flags: <defaults>
</compile_context>

<pallas_src>
import functools

import numpy as np
import jax
import jax.numpy as jnp
from jax.experimental import pallas as pl
from jax.experimental.pallas import tpu as pltpu


# ----------------------------------------------------------------------------- kernel

def _adain_kernel(x_ref, scale_ref, shift_ref, o_ref, *, eps, inv_hw):
    """Fused instance-norm + style modulation for one (batch, channel-tile) block.

    x_ref     : (1, TC, HW)  image rows, HW on the lane axis (lane-dense)
    scale_ref : (1, TC, 1)   precomputed per-channel style scale
    shift_ref : (1, TC, 1)   precomputed per-channel style shift
    o_ref     : (1, TC, HW)
    """
    x = x_ref[0].astype(jnp.float32)                                  # (TC, HW)

    # One-pass statistics over the lane axis (f32 accumulation).
    s = jnp.sum(x, axis=1, keepdims=True)                             # (TC, 1)
    sq = jnp.sum(x * x, axis=1, keepdims=True)                        # (TC, 1)
    mean = s * inv_hw
    var = jnp.maximum(sq * inv_hw - mean * mean, 0.0)                 # biased var

    scale = scale_ref[0].astype(jnp.float32)                          # (TC, 1)
    shift = shift_ref[0].astype(jnp.float32)                          # (TC, 1)

    # Fold normalize + modulate into a single FMA over the tile.
    a = scale * jax.lax.rsqrt(var + eps)                              # (TC, 1)
    b = shift - mean * a                                              # (TC, 1)
    o_ref[0] = (x * a + b).astype(o_ref.dtype)


# ----------------------------------------------------------------------------- wrapper

def _choose_channel_tile(C, HW, itemsize, target_bytes=2 << 20):
    """Largest multiple-of-8 divisor of C whose (TC, HW) tile is <= target_bytes."""
    if C <= 8 or C % 8 != 0:
        return C
    tc = 8
    for cand in range(8, C + 1, 8):
        if C % cand == 0 and cand * HW * itemsize <= target_bytes:
            tc = cand
    return tc


def adain(img, w, scale_weight, scale_bias, shift_weight, shift_bias, eps=1e-5):
    """AdaIN forward matching the PyTorch module.

    img          : (B, C, H, W)   NCHW
    w            : (B, w_dim)
    scale_weight : (C, w_dim)     torch nn.Linear(w_dim, C).weight layout
    scale_bias   : (C,)
    shift_weight : (C, w_dim)
    shift_bias   : (C,)
    returns      : (B, C, H, W), same dtype as img
    """
    B, C, H, W = img.shape
    HW = H * W
    itemsize = jnp.dtype(img.dtype).itemsize

    # Style projections hoisted out of the kernel (tiny XLA matmuls).
    w32 = w.astype(jnp.float32)
    scale = w32 @ scale_weight.astype(jnp.float32).T + scale_bias.astype(jnp.float32)
    shift = w32 @ shift_weight.astype(jnp.float32).T + shift_bias.astype(jnp.float32)
    scale_col = scale.reshape(B, C, 1)                                # (B, C, 1)
    shift_col = shift.reshape(B, C, 1)

    x = img.reshape(B, C, HW)                                          # HW lane-dense

    # TODO(synk): for very large HW (e.g. 256x256+ where even 8 rows exceed a few
    # MiB) switch to a two-phase grid over HW tiles (accumulate sum/sumsq, then
    # normalize) to bound VMEM independently of resolution.
    TC = _choose_channel_tile(C, HW, itemsize)
    num_c_tiles = C // TC

    block_bytes = TC * HW * itemsize
    # in + out double-buffered, plus headroom for the tiny scale/shift columns.
    vmem_bytes = int(min(64 << 20, max(16 << 20, 4 * block_bytes + (4 << 20))))

    out = pl.pallas_call(
        functools.partial(_adain_kernel, eps=float(eps), inv_hw=1.0 / HW),
        out_shape=jax.ShapeDtypeStruct((B, C, HW), img.dtype),
        grid=(B, num_c_tiles),
        in_specs=[
            pl.BlockSpec((1, TC, HW), lambda b, c: (b, c, 0)),
            pl.BlockSpec((1, TC, 1), lambda b, c: (b, c, 0)),
            pl.BlockSpec((1, TC, 1), lambda b, c: (b, c, 0)),
        ],
        out_specs=pl.BlockSpec((1, TC, HW), lambda b, c: (b, c, 0)),
        compiler_params=pltpu.CompilerParams(
            dimension_semantics=("parallel", "parallel"),
            vmem_limit_bytes=vmem_bytes,
        ),
    )(x, scale_col, shift_col)
    return out.reshape(B, C, H, W)


# ------------------------------------------------------------------ pure-JAX reference

def adain_reference(img, w, scale_weight, scale_bias, shift_weight, shift_bias, eps=1e-5):
    mean = jnp.mean(img, axis=(2, 3), keepdims=True)
    var = jnp.mean(jnp.square(img - mean), axis=(2, 3), keepdims=True)
    xn = (img - mean) / jnp.sqrt(var + eps)
    scale = w @ scale_weight.T + scale_bias         # (B, C)
    shift = w @ shift_weight.T + shift_bias         # (B, C)
    return scale[:, :, None, None] * xn + shift[:, :, None, None]


# ------------------------------------------------------------------------------- main

if __name__ == "__main__":
    key = jax.random.PRNGKey(0)
    B, C, H, W = 2, 4, 16, 16
    w_dim = 32

    k_img, k_w, k_sw, k_sb, k_hw, k_hb = jax.random.split(key, 6)
    img = jax.random.normal(k_img, (B, C, H, W), jnp.float32)
    wv = jax.random.normal(k_w, (B, w_dim), jnp.float32)

    bound = 1.0 / np.sqrt(w_dim)                    # torch nn.Linear default init
    scale_weight = jax.random.uniform(k_sw, (C, w_dim), jnp.float32, -bound, bound)
    scale_bias = jax.random.uniform(k_sb, (C,), jnp.float32, -bound, bound)
    shift_weight = jax.random.uniform(k_hw, (C, w_dim), jnp.float32, -bound, bound)
    shift_bias = jax.random.uniform(k_hb, (C,), jnp.float32, -bound, bound)

    out = adain(img, wv, scale_weight, scale_bias, shift_weight, shift_bias)
    out = jax.block_until_ready(out)

    ref = adain_reference(img, wv, scale_weight, scale_bias, shift_weight, shift_bias)
    assert out.shape == (B, C, H, W), out.shape
    assert out.dtype == img.dtype, out.dtype
    assert jnp.all(jnp.isfinite(out))
    assert jnp.allclose(out, ref, atol=1e-4, rtol=1e-4), float(jnp.max(jnp.abs(out - ref)))
    print("KERNEL_OK")
</pallas_src>

<mosaic_0001>
module attributes {stable_mosaic.version = 11 : i64} {
  func.func @_adain_kernel(%arg0: i32, %arg1: i32, %arg2: memref<1x4x256xf32, #tpu.memory_space<vmem>>, %arg3: memref<1x4x1xf32, #tpu.memory_space<vmem>>, %arg4: memref<1x4x1xf32, #tpu.memory_space<vmem>>, %arg5: memref<1x4x256xf32, #tpu.memory_space<vmem>>) attributes {dimension_semantics = [#tpu.dimension_semantics<parallel>, #tpu.dimension_semantics<parallel>], iteration_bounds = array<i64: 2, 1>, scalar_prefetch = 0 : i64, scratch_operands = 0 : i64, tpu.core_type = #tpu.core_type<tc>, window_params = [{transform_indices = @transform_0, window_bounds = array<i64: 1, 4, 256>}, {transform_indices = @transform_1, window_bounds = array<i64: 1, 4, 1>}, {transform_indices = @transform_2, window_bounds = array<i64: 1, 4, 1>}, {transform_indices = @transform_3, window_bounds = array<i64: 1, 4, 256>}]} {
    %c0 = arith.constant 0 : index
    %c0_0 = arith.constant 0 : index
    %c0_1 = arith.constant 0 : index
    %0 = vector.load %arg2[%c0, %c0_0, %c0_1] : memref<1x4x256xf32, #tpu.memory_space<vmem>>, vector<1x4x256xf32>
    %1 = vector.shape_cast %0 : vector<1x4x256xf32> to vector<4x256xf32>
    %cst = arith.constant dense<0.000000e+00> : vector<4xf32>
    %2 = vector.multi_reduction <add>, %1, %cst [1] : vector<4x256xf32> to vector<4xf32>
    %3 = vector.shape_cast %2 : vector<4xf32> to vector<4x1xf32>
    %4 = arith.mulf %1, %1 : vector<4x256xf32>
    %cst_2 = arith.constant dense<0.000000e+00> : vector<4xf32>
    %5 = vector.multi_reduction <add>, %4, %cst_2 [1] : vector<4x256xf32> to vector<4xf32>
    %6 = vector.shape_cast %5 : vector<4xf32> to vector<4x1xf32>
    %cst_3 = arith.constant 3.906250e-03 : f32
    %7 = vector.broadcast %cst_3 : f32 to vector<4x1xf32>
    %8 = arith.mulf %3, %7 : vector<4x1xf32>
    %cst_4 = arith.constant 3.906250e-03 : f32
    %9 = vector.broadcast %cst_4 : f32 to vector<4x1xf32>
    %10 = arith.mulf %6, %9 : vector<4x1xf32>
    %11 = arith.mulf %8, %8 : vector<4x1xf32>
    %12 = arith.subf %10, %11 : vector<4x1xf32>
    %cst_5 = arith.constant 0.000000e+00 : f32
    %13 = vector.broadcast %cst_5 : f32 to vector<4x1xf32>
    %14 = arith.maximumf %12, %13 : vector<4x1xf32>
    %c0_6 = arith.constant 0 : index
    %c0_7 = arith.constant 0 : index
    %c0_8 = arith.constant 0 : index
    %15 = vector.load %arg3[%c0_6, %c0_7, %c0_8] : memref<1x4x1xf32, #tpu.memory_space<vmem>>, vector<1x4x1xf32>
    %16 = vector.shape_cast %15 : vector<1x4x1xf32> to vector<4x1xf32>
    %c0_9 = arith.constant 0 : index
    %c0_10 = arith.constant 0 : index
    %c0_11 = arith.constant 0 : index
    %17 = vector.load %arg4[%c0_9, %c0_10, %c0_11] : memref<1x4x1xf32, #tpu.memory_space<vmem>>, vector<1x4x1xf32>
    %18 = vector.shape_cast %17 : vector<1x4x1xf32> to vector<4x1xf32>
    %cst_12 = arith.constant 9.99999974E-6 : f32
    %19 = vector.broadcast %cst_12 : f32 to vector<4x1xf32>
    %20 = arith.addf %14, %19 : vector<4x1xf32>
    %21 = math.rsqrt %20 : vector<4x1xf32>
    %22 = arith.mulf %16, %21 : vector<4x1xf32>
    %23 = arith.mulf %8, %22 : vector<4x1xf32>
    %24 = arith.subf %18, %23 : vector<4x1xf32>
    %25 = vector.broadcast %22 : vector<4x1xf32> to vector<4x256xf32>
    %26 = arith.mulf %1, %25 : vector<4x256xf32>
    %27 = vector.broadcast %24 : vector<4x1xf32> to vector<4x256xf32>
    %28 = arith.addf %26, %27 : vector<4x256xf32>
    %c0_13 = arith.constant 0 : index
    %c0_14 = arith.constant 0 : index
    %c0_15 = arith.constant 0 : index
    %29 = vector.load %arg5[%c0_13, %c0_14, %c0_15] : memref<1x4x256xf32, #tpu.memory_space<vmem>>, vector<1x4x256xf32>
    %30 = vector.shape_cast %29 : vector<1x4x256xf32> to vector<4x256xf32>
    %31 = vector.shape_cast %28 : vector<4x256xf32> to vector<1x4x256xf32>
    tpu.vector_store %arg5[%c0_13, %c0_14, %c0_15], %31 {strides = array<i32>} : memref<1x4x256xf32, #tpu.memory_space<vmem>>, vector<1x4x256xf32>,
    return
  }
  func.func @transform_0(%arg0: i32, %arg1: i32) -> (i32, i32, i32) {
    %c0_i32 = arith.constant 0 : i32
    %c0_i32_0 = arith.constant 0 : i32
    return %arg0, %arg1, %c0_i32 : i32, i32, i32
  }
  func.func @transform_1(%arg0: i32, %arg1: i32) -> (i32, i32, i32) {
    %c0_i32 = arith.constant 0 : i32
    %c0_i32_0 = arith.constant 0 : i32
    return %arg0, %arg1, %c0_i32 : i32, i32, i32
  }
  func.func @transform_2(%arg0: i32, %arg1: i32) -> (i32, i32, i32) {
    %c0_i32 = arith.constant 0 : i32
    %c0_i32_0 = arith.constant 0 : i32
    return %arg0, %arg1, %c0_i32 : i32, i32, i32
  }
  func.func @transform_3(%arg0: i32, %arg1: i32) -> (i32, i32, i32) {
    %c0_i32 = arith.constant 0 : i32
    %c0_i32_0 = arith.constant 0 : i32
    return %arg0, %arg1, %c0_i32 : i32, i32, i32
  }
}

</mosaic_0001>

<llo_original>
// kernel: tpu_custom_call.1
$region0: #{tpu_custom_call.1}
  #allocation0 [shape = 'u32[]', space=smem, size = 0x4, offset = 0x4, fixed_abs, tag = 'smem constant byte address 0x4 - core index']
  #allocation1 [shape = 'u32[144,128]{1,0:T(1,128)}', space=vmem, size = 0x12000, scoped, tag = 'internal scratch']
  %s0 = inlined_call_operand.vmem [shape: f32[2,4,256], index: 0, kind: input, shape index: {}]
  %s1 = inlined_call_operand.vmem [shape: f32[2,4,1], index: 1, kind: input, shape index: {}]
  %s2 = inlined_call_operand.vmem [shape: f32[2,4,1], index: 2, kind: input, shape index: {}]
  %s3 = inlined_call_operand.hbm [shape: f32[2,4,256], index: 3, kind: output, shape index: {}]
  %s4 = sld [smem:[#allocation0]]
  $region45: #{tpu_custom_call.1} parent=0
    _
  %s6 = ssub.s32 1, %s4
  %s7 = scalar_select 0, %s6, %s4
  $region1: #{tpu_custom_call.1} parent=0
    #allocation2 [shape = 'u8[8192]{0}', space=vmem, size = 0x2000, scoped, tag = 'output window, operand 0']
    #allocation3 [shape = 's32[2]{0}', space=sflag, size = 0x8, scoped, tag = 'scoped memory for tpu_custom_call.1']
    %8 = vsyncpa [#allocation3], 0
    %s9 = scalar_lea.sflag [#allocation3], 1
    %10 = vsyncpa %s9, 0
    loop: start=0, step=1, limit=4
    $region2: #{tpu_custom_call.1} parent=1 // loop_pre_header
      _
    $region3: #{tpu_custom_call.1} parent=1 // loop_header
      %s12 = sphi 0, %s16
      %p13 = scmp.ge.s32.totalorder %s12, 4
      %s19 = sphi 0, %s31
      %s20 = sphi 0, %s27
      %s21 = sphi 0, %s19
      %s22 = sphi 0, %s20
      %s23 = sphi 0, %s21
      %s24 = sphi 0, %s22
      %s36 = sphi 0, %s38
      %s39 = sphi 0, %s36
      %s40 = sphi 0, %s39
      %s56 = sphi 0, %s40
      %s64 = sphi 0, %s66
      %s67 = sphi 0, %s64
      %s68 = sphi 0, %s67
      %s84 = sphi 0, %s68
      %s92 = sphi 0, %s94
      %s95 = sphi 0, %s92
      %s96 = sphi 0, %s95
      %s112 = sphi 0, %s96
      %s120 = sphi 0, %s122
      %s123 = sphi 0, %s120
      %s124 = sphi 0, %s123
      %s140 = sphi 0, %s124
    $region4: #{tpu_custom_call.1} parent=1 // loop_header_branch
      %15 = sbr.rel (%p13) target = $region8
    $region5: #{tpu_custom_call.1} parent=1 // loop_body
      %s17 = ssub.s32 %s12, 1
      %s18 = ssub.s32 %s12, 2
      %s25 = sadd.s32 1, %s20
      %p26 = scmp.ge.s32.totalorder %s25, 1
      %s27 = scalar_select %p26, 0, %s25
      %s28 = sadd.s32 1, %s19
      %s29 = scalar_select %p26, %s28, %s19
      %p30 = scmp.ge.s32.totalorder %s29, 2
      %s31 = scalar_select %p30, 0, %s29
      %s32 = ssub.s32 %s19, %s31
      %s33 = ssub.s32 %s20, %s27
      %s34 = sor.u32 %s32, %s33
      %p35 = scmp.eq.s32.totalorder %s34, 0
      %s37 = sadd.s32 %s36, 1
      %s38 = scalar_select %p35, %s36, %s37
      %p41 = pneg %p35
      %p42 = scmp.eq.s32.totalorder %s12, 1
      %p43 = por %p41, %p42
      %p44 = scmp.ne.s32.totalorder %s36, %s39
      %p45 = scmp.eq.s32.totalorder %s12, 0
      %p46 = por %p44, %p45
      %p47 = scmp.ne.s32.totalorder %s36, %s39
      %p48 = scmp.eq.s32.totalorder %s17, 1
      %p49 = por %p47, %p48
      %p50 = scmp.ne.s32.totalorder %s39, %s40
      %p51 = scmp.eq.s32.totalorder %s17, 0
      %p52 = por %p50, %p51
      %p53 = scmp.ne.s32.totalorder %s39, %s40
      %p54 = scmp.eq.s32.totalorder %s18, 1
      %p55 = por %p53, %p54
      %p57 = scmp.ne.s32.totalorder %s40, %s56
      %p58 = scmp.eq.s32.totalorder %s18, 0
      %p59 = por %p57, %p58
      %s60 = ssub.s32 %s19, %s31
      %s61 = ssub.s32 %s20, %s27
      %s62 = sor.u32 %s60, %s61
      %p63 = scmp.eq.s32.totalorder %s62, 0
      %s65 = sadd.s32 %s64, 1
      %s66 = scalar_select %p63, %s64, %s65
      %p69 = pneg %p63
      %p70 = scmp.eq.s32.totalorder %s12, 1
      %p71 = por %p69, %p70
      %p72 = scmp.ne.s32.totalorder %s64, %s67
      %p73 = scmp.eq.s32.totalorder %s12, 0
      %p74 = por %p72, %p73
      %p75 = scmp.ne.s32.totalorder %s64, %s67
      %p76 = scmp.eq.s32.totalorder %s17, 1
      %p77 = por %p75, %p76
      %p78 = scmp.ne.s32.totalorder %s67, %s68
      %p79 = scmp.eq.s32.totalorder %s17, 0
      %p80 = por %p78, %p79
      %p81 = scmp.ne.s32.totalorder %s67, %s68
      %p82 = scmp.eq.s32.totalorder %s18, 1
      %p83 = por %p81, %p82
      %p85 = scmp.ne.s32.totalorder %s68, %s84
      %p86 = scmp.eq.s32.totalorder %s18, 0
      %p87 = por %p85, %p86
      %s88 = ssub.s32 %s19, %s31
      %s89 = ssub.s32 %s20, %s27
      %s90 = sor.u32 %s88, %s89
      %p91 = scmp.eq.s32.totalorder %s90, 0
      %s93 = sadd.s32 %s92, 1
      %s94 = scalar_select %p91, %s92, %s93
      %p97 = pneg %p91
      %p98 = scmp.eq.s32.totalorder %s12, 1
      %p99 = por %p97, %p98
      %p100 = scmp.ne.s32.totalorder %s92, %s95
      %p101 = scmp.eq.s32.totalorder %s12, 0
      %p102 = por %p100, %p101
      %p103 = scmp.ne.s32.totalorder %s92, %s95
      %p104 = scmp.eq.s32.totalorder %s17, 1
      %p105 = por %p103, %p104
      %p106 = scmp.ne.s32.totalorder %s95, %s96
      %p107 = scmp.eq.s32.totalorder %s17, 0
      %p108 = por %p106, %p107
      %p109 = scmp.ne.s32.totalorder %s95, %s96
      %p110 = scmp.eq.s32.totalorder %s18, 1
      %p111 = por %p109, %p110
      %p113 = scmp.ne.s32.totalorder %s96, %s112
      %p114 = scmp.eq.s32.totalorder %s18, 0
      %p115 = por %p113, %p114
      %s116 = ssub.s32 %s19, %s31
      %s117 = ssub.s32 %s20, %s27
      %s118 = sor.u32 %s116, %s117
      %p119 = scmp.eq.s32.totalorder %s118, 0
      %s121 = sadd.s32 %s120, 1
      %s122 = scalar_select %p119, %s120, %s121
      %p125 = pneg %p119
      %p126 = scmp.eq.s32.totalorder %s12, 1
      %p127 = por %p125, %p126
      %p128 = scmp.ne.s32.totalorder %s120, %s123
      %p129 = scmp.eq.s32.totalorder %s12, 0
      %p130 = por %p128, %p129
      %p131 = scmp.ne.s32.totalorder %s120, %s123
      %p132 = scmp.eq.s32.totalorder %s17, 1
      %p133 = por %p131, %p132
      %p134 = scmp.ne.s32.totalorder %s123, %s124
      %p135 = scmp.eq.s32.totalorder %s17, 0
      %p136 = por %p134, %p135
      %p137 = scmp.ne.s32.totalorder %s123, %s124
      %p138 = scmp.eq.s32.totalorder %s18, 1
      %p139 = por %p137, %p138
      %p141 = scmp.ne.s32.totalorder %s124, %s140
      %p142 = scmp.eq.s32.totalorder %s18, 0
      %p143 = por %p141, %p142
      %p144 = scmp.le.s32.totalorder 1, %s12
      %p145 = scmp.lt.s32.totalorder %s12, 3
      %p146 = pnand %p144, %p145
      %p147 = pneg %p146
      // Predicated region
      $region9: #{tpu_custom_call.1} parent=5 // pred_check
        _
      $region10: #{tpu_custom_call.1} parent=5 // pred_check_branch
        %149 = sbr.rel (%p146) target = $region12
      $region11: #{tpu_custom_call.1} parent=5 // pred_region
        %s150 = ssub.s32 %s12, 1
      $region12: #{tpu_custom_call.1} parent=5 // pred_fallthru
        _
      %p151 = scmp.lt.s32.totalorder %s12, 2
      // Predicated region
      $region13: #{tpu_custom_call.1} parent=5 // pred_check
        %p152 = pneg %p151
      $region14: #{tpu_custom_call.1} parent=5 // pred_check_branch
        %154 = sbr.rel (%p152) target = $region16
      $region15: #{tpu_custom_call.1} parent=5 // pred_region
        // Predicated region
        $region17: #{tpu_custom_call.1} parent=15 // pred_check
          %p155 = pneg %p46
        $region18: #{tpu_custom_call.1} parent=15 // pred_check_branch
          %157 = sbr.rel (%p155) target = $region20
        $region19: #{tpu_custom_call.1} parent=15 // pred_region
          %p158 = scmp.lt.s32.totalorder %s19, 1
          %s159 = scalar_select %p158, %s19, 1
          %p160 = scmp.lt.s32.totalorder %s20, 0
          %s161 = scalar_select %p160, %s20, 0
          %s162 = smul.addr %s161, 2
          %s163 = smul.addr %s159, 2
          %s164 = sadd.s32 %s162, %s163
          %s165 = smul.addr %s164, 4
          %s166 = scalar_lea.vmem %s0, %s165
        $region20: #{tpu_custom_call.1} parent=15 // pred_fallthru
          _
        // Predicated region
        $region21: #{tpu_custom_call.1} parent=15 // pred_check
          %p167 = pneg %p74
        $region22: #{tpu_custom_call.1} parent=15 // pred_check_branch
          %169 = sbr.rel (%p167) target = $region24
        $region23: #{tpu_custom_call.1} parent=15 // pred_region
          %p170 = scmp.lt.s32.totalorder %s19, 1
          %s171 = scalar_select %p170, %s19, 1
          %p172 = scmp.lt.s32.totalorder %s20, 0
          %s173 = scalar_select %p172, %s20, 0
          %s174 = sadd.s32 %s173, %s171
          %s175 = smul.addr %s174, 4
          %s176 = scalar_lea.vmem %s1, %s175
        $region24: #{tpu_custom_call.1} parent=15 // pred_fallthru
          _
        // Predicated region
        $region25: #{tpu_custom_call.1} parent=15 // pred_check
          %p177 = pneg %p102
        $region26: #{tpu_custom_call.1} parent=15 // pred_check_branch
          %179 = sbr.rel (%p177) target = $region28
        $region27: #{tpu_custom_call.1} parent=15 // pred_region
          %p180 = scmp.lt.s32.totalorder %s19, 1
          %s181 = scalar_select %p180, %s19, 1
          %p182 = scmp.lt.s32.totalorder %s20, 0
          %s183 = scalar_select %p182, %s20, 0
          %s184 = sadd.s32 %s183, %s181
          %s185 = smul.addr %s184, 4
          %s186 = scalar_lea.vmem %s2, %s185
        $region28: #{tpu_custom_call.1} parent=15 // pred_fallthru
          _
      $region16: #{tpu_custom_call.1} parent=5 // pred_fallthru
        _
      %p187 = scmp.le.s32.totalorder 1, %s12
      %p188 = scmp.lt.s32.totalorder %s12, 3
      %p189 = pnand %p187, %p188
      %p190 = pneg %p189
      // Predicated region
      $region29: #{tpu_custom_call.1} parent=5 // pred_check
        _
      $region30: #{tpu_custom_call.1} parent=5 // pred_check_branch
        %192 = sbr.rel (%p189) target = $region32
      $region31: #{tpu_custom_call.1} parent=5 // pred_region
        %s193 = ssub.s32 %s12, 1
        %p194 = scmp.lt.s32.totalorder %s21, 1
        %s195 = scalar_select %p194, %s21, 1
        %p196 = scmp.lt.s32.totalorder %s22, 0
        %s197 = scalar_select %p196, %s22, 0
        %s198 = smul.addr %s197, 2
        %s199 = smul.addr %s195, 2
        %s200 = sadd.s32 %s198, %s199
        %s201 = smul.addr %s200, 4
        %s202 = scalar_lea.vmem %s0, %s201
        %p203 = pneg %p52
        %p204 = pneg %p49
        %p205 = scmp.lt.s32.totalorder %s21, 1
        %s206 = scalar_select %p205, %s21, 1
        %p207 = scmp.lt.s32.totalorder %s22, 0
        %s208 = scalar_select %p207, %s22, 0
        %s209 = sadd.s32 %s208, %s206
        %s210 = smul.addr %s209, 4
        %s211 = scalar_lea.vmem %s1, %s210
        %p212 = pneg %p80
        %p213 = pneg %p77
        %p214 = scmp.lt.s32.totalorder %s21, 1
        %s215 = scalar_select %p214, %s21, 1
        %p216 = scmp.lt.s32.totalorder %s22, 0
        %s217 = scalar_select %p216, %s22, 0
        %s218 = sadd.s32 %s217, %s215
        %s219 = smul.addr %s218, 4
        %s220 = scalar_lea.vmem %s2, %s219
        %p221 = pneg %p108
        %p222 = pneg %p105
        %p223 = pneg %p136
        %p224 = pneg %p133
        %s225 = sand.u32 %s123, 1
        %s226 = scalar_lea.sflag [#allocation3], %s225
        %s227 = sand.u32 %s123, 1
        %s228 = smul.addr %s227, 8
        %s229 = scalar_lea.vmem [#allocation2], %s228
        %p230 = scmp.lt.s32.totalorder %s21, 1
        %s231 = scalar_select %p230, %s21, 1
        %p232 = scmp.lt.s32.totalorder %s22, 0
        %s233 = scalar_select %p232, %s22, 0
        %s234 = smul.addr %s233, 2
        %s235 = smul.addr %s231, 2
        %s236 = sadd.s32 %s234, %s235
        %s237 = smul.addr %s236, 4
        %s238 = scalar_lea.vmem %s0, %s237
        %p239 = scmp.lt.s32.totalorder %s21, 1
        %s240 = scalar_select %p239, %s21, 1
        %p241 = scmp.lt.s32.totalorder %s22, 0
        %s242 = scalar_select %p241, %s22, 0
        %s243 = sadd.s32 %s242, %s240
        %s244 = smul.addr %s243, 4
        %s245 = scalar_lea.vmem %s1, %s244
        %p246 = scmp.lt.s32.totalorder %s21, 1
        %s247 = scalar_select %p246, %s21, 1
        %p248 = scmp.lt.s32.totalorder %s22, 0
        %s249 = scalar_select %p248, %s22, 0
        %s250 = sadd.s32 %s249, %s247
        %s251 = smul.addr %s250, 4
        %s252 = scalar_lea.vmem %s2, %s251
        %v253 = vld [vmem:[%s238] sm:$0xff]
        %v255 = vcombine.high %v253, %v253
        %vm257 = vcmask 1043456
        %v258 = vsel %vm257, %v253, 0.0
        %v259 = vsel %vm257, %v255, 0.0
        %v260 = vadd.f32 %v258, %v259
        %261 = vadd.xlane.f32.xlu0 %v260
        %v262 = vpop.xlane.xlu0 %261
        %v263 = vmul.f32 %v253, %v253
        %v265 = vcombine.high %v263, %v263
        %v267 = vsel %vm257, %v263, 0.0
        %v268 = vsel %vm257, %v265, 0.0
        %v269 = vadd.f32 %v267, %v268
        %270 = vadd.xlane.f32.xlu0 %v269
        %v271 = vpop.xlane.xlu0 %270
        %v272 = vmul.f32 %v262, 0.00390625
        %v273 = vmul.f32 %v271, 0.00390625
        %v274 = vmul.f32 %v272, %v272
        %v275 = vsub.f32 %v273, %v274
        %v276 = vmax.f32 %v275, 0.0
        %v277 = vld [vmem:[%s245] sm:$0xf]
        %v278 = vld [vmem:[%s252] sm:$0xf]
        %v279 = vadd.f32 %v276, 1e-05
        %v280 = vrsqrt.pop %v279
        %v281 = vmul.f32 %v277, %v280
        %v282 = vmul.f32 %v272, %v281
        %v283 = vsub.f32 %v278, %v282
        %285 = vset.pattern.permute.xlu0 0
        %286 = vperm.xlu0 %285, %v281
        %v287 = vpop.permute.xlu0 %286
        %v289 = vunpack.c.l.s4 839922192
        %v290 = vunpack.c.0.s8 %v289
        %v291 = vlaneseq
        %v292 = vshrl.u32 %v291, 7
        %v293 = vsub.s32 %v290, %v292
        %v294 = vrot.slane %v287, %v293
        %v296 = vmul.f32 %v253, %v294
        %298 = vset.pattern.permute.xlu0 0
        %299 = vperm.xlu0 %298, %v283
        %v300 = vpop.permute.xlu0 %299
        %v302 = vunpack.c.l.s4 839922192
        %v303 = vunpack.c.0.s8 %v302
        %v304 = vlaneseq
        %v305 = vshrl.u32 %v304, 7
        %v306 = vsub.s32 %v303, %v305
        %v307 = vrot.slane %v300, %v306
        %v309 = vadd.f32 %v296, %v307
        %310 = vst [vmem:[%s229] sm:$0xff] %v309
        %s311 = sand.u32 %s123, 1
        %s312 = scalar_lea.sflag [#allocation3], %s311
        %s313 = sand.u32 %s123, 1
        %s314 = smul.addr %s313, 8
        %s315 = scalar_lea.vmem [#allocation2], %s314
        // Predicated region
        $region33: #{tpu_custom_call.1} parent=31 // pred_check
          %p316 = pneg %p133
        $region34: #{tpu_custom_call.1} parent=31 // pred_check_branch
          %318 = sbr.rel (%p316) target = $region36
        $region35: #{tpu_custom_call.1} parent=31 // pred_region
          %s320 = ssub.s32 128, 128
          %321 = vsyncadd %s312, %s320
          %s322 = smul.addr %s22, 2
          %s323 = smul.addr %s21, 2
          %s324 = sadd.s32 %s322, %s323
          %s325 = smul.addr %s324, 64
          %s326 = scalar_lea.hbm %s3, %s325
          %s328 = sshll.u32 %s315, 4
          %s329 = int_to_ptr.vmem [resolvable:$true] %s328
          %331 = dma.vmem_to_hbm [thread:$0]  %s329, 128, %s326, %s312
        $region36: #{tpu_custom_call.1} parent=31 // pred_fallthru
          _
      $region32: #{tpu_custom_call.1} parent=5 // pred_fallthru
        _
      %p332 = scmp.le.s32.totalorder 2, %s12
      // Predicated region
      $region37: #{tpu_custom_call.1} parent=5 // pred_check
        %p333 = pneg %p332
      $region38: #{tpu_custom_call.1} parent=5 // pred_check_branch
        %335 = sbr.rel (%p333) target = $region40
      $region39: #{tpu_custom_call.1} parent=5 // pred_region
        %s336 = ssub.s32 %s12, 2
        // Predicated region
        $region41: #{tpu_custom_call.1} parent=39 // pred_check
          %p337 = pneg %p139
        $region42: #{tpu_custom_call.1} parent=39 // pred_check_branch
          %339 = sbr.rel (%p337) target = $region44
        $region43: #{tpu_custom_call.1} parent=39 // pred_region
          %s340 = sand.u32 %s124, 1
          %s341 = scalar_lea.sflag [#allocation3], %s340
          %s342 = sand.u32 %s124, 1
          %s343 = smul.addr %s342, 8
          %s344 = scalar_lea.vmem [#allocation2], %s343
          %345 = dma.done %s341, 128
        $region44: #{tpu_custom_call.1} parent=39 // pred_fallthru
          _
      $region40: #{tpu_custom_call.1} parent=5 // pred_fallthru
        _
    $region6: #{tpu_custom_call.1} parent=1 // loop_footer
      %s16 = sadd.s32 1, %s12
    $region7: #{tpu_custom_call.1} parent=1 // loop_footer_branch
      %11 = sbr.rel target = $region3
    $region8: #{tpu_custom_call.1} parent=1 // loop_exit
      _
    %346 = vsyncpa [#allocation3], 1
    %s347 = scalar_lea.sflag [#allocation3], 1
    %348 = vsyncpa %s347, 1

</llo_original>
